<compile_context>
chip_gen: v6e
topology: v6e:2x2x1
jax: 0.10.0
libtpu: 0.0.40
codegen_flags: <defaults>
</compile_context>

<pallas_src>
import functools

import numpy as np
import jax
import jax.numpy as jnp
from jax.experimental import pallas as pl
from jax.experimental.pallas import tpu as pltpu


def _round_up(x: int, m: int) -> int:
    return ((x + m - 1) // m) * m


def _next_pow2(x: int) -> int:
    return 1 << (max(1, x) - 1).bit_length()


def _pick_n_tile(n_pad: int) -> int:
    # Largest lane tile (multiple of 128) that divides N_pad; 512-1024-wide
    # tiles reach ~85% of HBM roofline on v6e and still fit v7x's VMEM budget.
    for t in (1024, 512, 256, 128):
        if n_pad % t == 0:
            return t
    return n_pad


# ----------------------------------------------------------------------------
# Pallas kernel: tiled, lane-dense cost matrix
# ----------------------------------------------------------------------------
def _cost_matrix_kernel(cost_class: float, cost_l1: float, fold_l1: bool):
    cc = float(cost_class)
    cl1 = float(cost_l1)

    def kernel(out_ref, tgt_ref, cost_ref):
        # out_ref : (1, 3, N_TILE)   [logit; x; y] rows, N on lanes
        # tgt_ref : (1, T_pad, 2)    [x, y] per target row (pre-scaled if fold)
        # cost_ref: (1, T_pad, N_TILE)
        logits = out_ref[:, 0:1, :]                       # (1, 1, N_TILE)
        px = out_ref[:, 1:2, :]
        py = out_ref[:, 2:3, :]
        tx = tgt_ref[:, :, 0:1]                           # (1, T_pad, 1)
        ty = tgt_ref[:, :, 1:2]
        # -logsigmoid(x) = softplus(-x) = max(-x, 0) + log1p(exp(-|x|)) (stable)
        cls = cc * (jnp.maximum(-logits, 0.0)
                    + jnp.log1p(jnp.exp(-jnp.abs(logits))))
        if fold_l1:
            # a*|u - v| = |a*u - a*v| for a >= 0; tx/ty already scaled host-side,
            # px/py scaled here on the thin (1,1,N_TILE) row -> 6 VALU ops/elem.
            l1 = jnp.abs(px * cl1 - tx) + jnp.abs(py * cl1 - ty)
            cost_ref[...] = cls + l1
        else:
            l1 = jnp.abs(px - tx) + jnp.abs(py - ty)
            cost_ref[...] = cls + cl1 * l1

    return kernel


@functools.partial(
    jax.jit,
    static_argnames=("cost_class", "cost_l1", "fold_l1", "n_pad", "n_tile",
                     "n_valid"),
)
def _compute_cost_matrix(outputs, tgt_pos, *, cost_class, cost_l1, fold_l1,
                         n_pad, n_tile, n_valid):
    """outputs: (B, N, 3) model predictions, tgt_pos: (B, T_pad, 2).
       Returns cost of shape (B, T_pad, n_valid) with cost[b, t, n]."""
    B, N, _ = outputs.shape
    T_pad = tgt_pos.shape[1]
    outputs = outputs.astype(jnp.float32)

    # Lane-dense prediction slab (B, 3, N_pad): layout plumbing (one small XLA
    # pass).  In-kernel transpose of natural (N_TILE, 3) blocks was considered
    # but kept host-side for lowering robustness of the 3-wide axis.
    out_t = jnp.transpose(outputs, (0, 2, 1))
    out_t = jnp.pad(out_t, ((0, 0), (0, 0), (0, n_pad - N)))

    grid = (B, n_pad // n_tile)
    cost = pl.pallas_call(
        _cost_matrix_kernel(cost_class, cost_l1, fold_l1),
        out_shape=jax.ShapeDtypeStruct((B, T_pad, n_pad), jnp.float32),
        grid=grid,
        in_specs=[
            pl.BlockSpec((1, 3, n_tile), lambda b, nt: (b, 0, nt)),
            pl.BlockSpec((1, T_pad, 2), lambda b, nt: (b, 0, 0)),
        ],
        out_specs=pl.BlockSpec((1, T_pad, n_tile), lambda b, nt: (b, 0, nt)),
        compiler_params=pltpu.CompilerParams(
            # Independent blocks -> both axes parallel (v7x: sharded over 2 TCs).
            dimension_semantics=("parallel", "parallel")),
        # Per-step VMEM (out + in, double-buffered) is well under the scoped
        # default on all generations -> no vmem_limit_bytes override needed.
    )(out_t, tgt_pos)

    # Trim padded prediction lanes on-device before the host copy.
    return cost[:, :, :n_valid]


# ----------------------------------------------------------------------------
# Host-side Hungarian algorithm (numpy) — replaces scipy.linear_sum_assignment
# ----------------------------------------------------------------------------
# TODO(synk): linear_sum_assignment is a sequential combinatorial algorithm with
# no Pallas/TPU equivalent; it runs on host in numpy.
def _lsa_rows_leq_cols(cost):
    n, m = cost.shape
    INF = float("inf")
    u = [0.0] * (n + 1)
    v = [0.0] * (m + 1)
    p = [0] * (m + 1)
    way = [0] * (m + 1)
    for i in range(1, n + 1):
        p[0] = i
        j0 = 0
        minv = [INF] * (m + 1)
        used = [False] * (m + 1)
        while True:
            used[j0] = True
            i0 = p[j0]
            delta = INF
            j1 = 0
            for j in range(1, m + 1):
                if not used[j]:
                    cur = cost[i0 - 1, j - 1] - u[i0] - v[j]
                    if cur < minv[j]:
                        minv[j] = cur
                        way[j] = j0
                    if minv[j] < delta:
                        delta = minv[j]
                        j1 = j
            for j in range(m + 1):
                if used[j]:
                    u[p[j]] += delta
                    v[j] -= delta
                else:
                    minv[j] -= delta
            j0 = j1
            if p[j0] == 0:
                break
        while True:
            j1 = way[j0]
            p[j0] = p[j1]
            j0 = j1
            if j0 == 0:
                break
    row_to_col = [0] * n
    for j in range(1, m + 1):
        if p[j] != 0:
            row_to_col[p[j] - 1] = j - 1
    return np.arange(n, dtype=np.int64), np.asarray(row_to_col, dtype=np.int64)


def linear_sum_assignment_np(cost):
    cost = np.asarray(cost, dtype=np.float64)
    if cost.shape[0] <= cost.shape[1]:
        return _lsa_rows_leq_cols(cost)
    r, c = _lsa_rows_leq_cols(cost.T)
    order = np.argsort(c)
    return c[order], r[order]


# ----------------------------------------------------------------------------
# HungarianMatcher wrapper
# ----------------------------------------------------------------------------
class HungarianMatcherPallas:
    def __init__(self, cost_class: float = 10.0, cost_l1: float = 1.0):
        self.cost_class = float(cost_class)
        self.cost_l1 = float(cost_l1)
        # Folding a*|u-v| = |a*u - a*v| requires a >= 0; otherwise fall back to
        # the explicit per-element multiply inside the kernel.
        self.fold_l1 = self.cost_l1 >= 0.0

    def __call__(self, outputs, targets, return_cost=False):
        outputs = jnp.asarray(outputs)
        B, N, _ = outputs.shape
        T_max = max((int(t.shape[0]) for t in targets), default=0)

        # Shape stabilization: N_pad / N_TILE are fixed by the model's N;
        # T_pad is bucketed (8-aligned next power of two) so varying per-call
        # target counts don't retrace/recompile the pallas_call.
        n_pad = _round_up(max(N, 1), 128)
        n_tile = _pick_n_tile(n_pad)
        t_pad = _next_pow2(_round_up(max(T_max, 1), 8))

        # Padded target positions (B, T_pad, 2); assembled in numpy anyway, so
        # the cost_l1 pre-scale is free.  Padded rows are sliced off on the
        # host and can never be selected by the label==1 mask.
        tgt_pos = np.zeros((B, t_pad, 2), np.float32)
        for i, t in enumerate(targets):
            tnp = np.asarray(t, dtype=np.float32)
            if tnp.shape[0]:
                tgt_pos[i, : tnp.shape[0]] = tnp[:, 1:]
        if self.fold_l1:
            tgt_pos *= self.cost_l1

        cost_dev = _compute_cost_matrix(
            outputs, jnp.asarray(tgt_pos),
            cost_class=self.cost_class, cost_l1=self.cost_l1,
            fold_l1=self.fold_l1, n_pad=n_pad, n_tile=n_tile, n_valid=N)
        cost_np = np.asarray(cost_dev)        # (B, T_pad, N), cost[b, t, n]

        indices = []
        for i, t in enumerate(targets):
            tnp = np.asarray(t)
            Ti = tnp.shape[0]
            labels = tnp[:, 0] if Ti else np.empty((0,))
            mask = labels == 1
            if mask.sum() == 0:
                indices.append(
                    (np.empty(0, dtype=np.int64), np.empty(0, dtype=np.int64))
                )
                continue
            # Recover the (N, num_selected) sub-matrix: host transpose is a view.
            sub = cost_np[i, :Ti, :].T[:, mask]
            row_ind, col_ind = linear_sum_assignment_np(sub)
            target_indices = np.nonzero(mask)[0][col_ind].astype(np.int64)
            indices.append((row_ind.astype(np.int64), target_indices))

        if return_cost:
            return indices, cost_dev
        return indices


# ----------------------------------------------------------------------------
# Main
# ----------------------------------------------------------------------------
if __name__ == "__main__":
    key = jax.random.PRNGKey(0)
    B, N = 2, 8  # batch, max_num_targets (predictions per sample)
    k1, k2 = jax.random.split(key)

    outputs = jax.random.normal(k1, (B, N, 3), dtype=jnp.float32)

    # targets: list of [T_i, 3]  ([label, x, y]); labels in {0, 1}
    t_sizes = [5, 6]
    targets = []
    kk = k2
    for Ti in t_sizes:
        kk, ka, kb = jax.random.split(kk, 3)
        labels = jax.random.bernoulli(ka, 0.6, (Ti,)).astype(jnp.float32)
        pos = jax.random.normal(kb, (Ti, 2), dtype=jnp.float32)
        targets.append(jnp.concatenate([labels[:, None], pos], axis=1))

    matcher = HungarianMatcherPallas(cost_class=10.0, cost_l1=1.0)
    indices, cost = matcher(outputs, targets, return_cost=True)
    jax.block_until_ready(cost)

    # Cross-check the Pallas cost matrix against a plain-JAX reference.
    T_max = max(int(t.shape[0]) for t in targets)
    tgt_pad = np.zeros((B, T_max, 2), np.float32)
    for i, t in enumerate(targets):
        tgt_pad[i, : t.shape[0]] = np.asarray(t)[:, 1:]
    logits = outputs[:, :, 0]
    ref_cls = -jax.nn.log_sigmoid(logits)[:, :, None]                    # (B, N, 1)
    pos = outputs[:, :, 1:]
    ref_l1 = jnp.abs(pos[:, :, None, :] - jnp.asarray(tgt_pad)[:, None, :, :]).sum(-1)
    ref = 10.0 * ref_cls + 1.0 * ref_l1                                  # (B, N, T)
    got = np.asarray(cost)[:, :T_max, :].transpose(0, 2, 1)              # (B, N, T)
    np.testing.assert_allclose(got, np.asarray(ref), rtol=1e-5, atol=1e-5)

    # Sanity: each returned pair has matched lengths and valid index ranges.
    for i, (row, col) in enumerate(indices):
        assert row.shape == col.shape
        assert (row < N).all() if row.size else True
        assert (col < targets[i].shape[0]).all() if col.size else True

    print("KERNEL_OK")
</pallas_src>

<mosaic_0001>
module attributes {stable_mosaic.version = 11 : i64} {
  func.func @kernel(%arg0: i32, %arg1: i32, %arg2: memref<1x3x128xf32, #tpu.memory_space<vmem>>, %arg3: memref<1x8x2xf32, #tpu.memory_space<vmem>>, %arg4: memref<1x8x128xf32, #tpu.memory_space<vmem>>) attributes {dimension_semantics = [#tpu.dimension_semantics<parallel>, #tpu.dimension_semantics<parallel>], iteration_bounds = array<i64: 2, 1>, scalar_prefetch = 0 : i64, scratch_operands = 0 : i64, tpu.core_type = #tpu.core_type<tc>, window_params = [{transform_indices = @transform_0, window_bounds = array<i64: 1, 3, 128>}, {transform_indices = @transform_1, window_bounds = array<i64: 1, 8, 2>}, {transform_indices = @transform_2, window_bounds = array<i64: 1, 8, 128>}]} {
    %c0 = arith.constant 0 : index
    %c0_0 = arith.constant 0 : index
    %c0_1 = arith.constant 0 : index
    %0 = vector.load %arg2[%c0, %c0_0, %c0_1] : memref<1x3x128xf32, #tpu.memory_space<vmem>>, vector<1x1x128xf32>
    %c0_2 = arith.constant 0 : index
    %c1 = arith.constant 1 : index
    %c0_3 = arith.constant 0 : index
    %1 = vector.load %arg2[%c0_2, %c1, %c0_3] : memref<1x3x128xf32, #tpu.memory_space<vmem>>, vector<1x1x128xf32>
    %c0_4 = arith.constant 0 : index
    %c2 = arith.constant 2 : index
    %c0_5 = arith.constant 0 : index
    %2 = vector.load %arg2[%c0_4, %c2, %c0_5] : memref<1x3x128xf32, #tpu.memory_space<vmem>>, vector<1x1x128xf32>
    %c0_6 = arith.constant 0 : index
    %c0_7 = arith.constant 0 : index
    %c0_8 = arith.constant 0 : index
    %3 = vector.load %arg3[%c0_6, %c0_7, %c0_8] : memref<1x8x2xf32, #tpu.memory_space<vmem>>, vector<1x8x1xf32>
    %c0_9 = arith.constant 0 : index
    %c0_10 = arith.constant 0 : index
    %c1_11 = arith.constant 1 : index
    %4 = vector.load %arg3[%c0_9, %c0_10, %c1_11] : memref<1x8x2xf32, #tpu.memory_space<vmem>>, vector<1x8x1xf32>
    %cst = arith.constant 0.000000e+00 : f32
    %5 = vector.broadcast %cst : f32 to vector<1x1x128xf32>
    %6 = arith.subf %5, %0 : vector<1x1x128xf32>
    %cst_12 = arith.constant 0.000000e+00 : f32
    %7 = vector.broadcast %cst_12 : f32 to vector<1x1x128xf32>
    %8 = arith.maximumf %6, %7 : vector<1x1x128xf32>
    %9 = math.absf %0 : vector<1x1x128xf32>
    %cst_13 = arith.constant 0.000000e+00 : f32
    %10 = vector.broadcast %cst_13 : f32 to vector<1x1x128xf32>
    %11 = arith.subf %10, %9 : vector<1x1x128xf32>
    %12 = math.exp %11 : vector<1x1x128xf32>
    %13 = math.log1p %12 : vector<1x1x128xf32>
    %14 = arith.addf %8, %13 : vector<1x1x128xf32>
    %cst_14 = arith.constant 1.000000e+01 : f32
    %15 = vector.broadcast %cst_14 : f32 to vector<1x1x128xf32>
    %16 = arith.mulf %15, %14 : vector<1x1x128xf32>
    %cst_15 = arith.constant 1.000000e+00 : f32
    %17 = vector.broadcast %cst_15 : f32 to vector<1x1x128xf32>
    %18 = arith.mulf %1, %17 : vector<1x1x128xf32>
    %19 = vector.broadcast %18 : vector<1x1x128xf32> to vector<1x8x128xf32>
    %20 = vector.broadcast %3 : vector<1x8x1xf32> to vector<1x8x128xf32>
    %21 = arith.subf %19, %20 : vector<1x8x128xf32>
    %22 = math.absf %21 : vector<1x8x128xf32>
    %cst_16 = arith.constant 1.000000e+00 : f32
    %23 = vector.broadcast %cst_16 : f32 to vector<1x1x128xf32>
    %24 = arith.mulf %2, %23 : vector<1x1x128xf32>
    %25 = vector.broadcast %24 : vector<1x1x128xf32> to vector<1x8x128xf32>
    %26 = vector.broadcast %4 : vector<1x8x1xf32> to vector<1x8x128xf32>
    %27 = arith.subf %25, %26 : vector<1x8x128xf32>
    %28 = math.absf %27 : vector<1x8x128xf32>
    %29 = arith.addf %22, %28 : vector<1x8x128xf32>
    %30 = vector.broadcast %16 : vector<1x1x128xf32> to vector<1x8x128xf32>
    %31 = arith.addf %30, %29 : vector<1x8x128xf32>
    %c0_17 = arith.constant 0 : index
    %c0_18 = arith.constant 0 : index
    %c0_19 = arith.constant 0 : index
    %32 = vector.load %arg4[%c0_17, %c0_18, %c0_19] : memref<1x8x128xf32, #tpu.memory_space<vmem>>, vector<1x8x128xf32>
    tpu.vector_store %arg4[%c0_17, %c0_18, %c0_19], %31 {strides = array<i32>} : memref<1x8x128xf32, #tpu.memory_space<vmem>>, vector<1x8x128xf32>,
    return
  }
  func.func @transform_0(%arg0: i32, %arg1: i32) -> (i32, i32, i32) {
    %c0_i32 = arith.constant 0 : i32
    %c0_i32_0 = arith.constant 0 : i32
    return %arg0, %c0_i32, %arg1 : i32, i32, i32
  }
  func.func @transform_1(%arg0: i32, %arg1: i32) -> (i32, i32, i32) {
    %c0_i32 = arith.constant 0 : i32
    %c0_i32_0 = arith.constant 0 : i32
    %c0_i32_1 = arith.constant 0 : i32
    return %arg0, %c0_i32, %c0_i32_0 : i32, i32, i32
  }
  func.func @transform_2(%arg0: i32, %arg1: i32) -> (i32, i32, i32) {
    %c0_i32 = arith.constant 0 : i32
    %c0_i32_0 = arith.constant 0 : i32
    return %arg0, %c0_i32, %arg1 : i32, i32, i32
  }
}

</mosaic_0001>

<llo_original>
// kernel: _compute_cost_matrix.1
$region0: #{_compute_cost_matrix.1}
  #allocation0 [shape = 'u32[]', space=smem, size = 0x4, offset = 0x4, fixed_abs, tag = 'smem constant byte address 0x4 - core index']
  #allocation1 [shape = 'u32[144,128]{1,0:T(1,128)}', space=vmem, size = 0x12000, scoped, tag = 'internal scratch']
  %s0 = inlined_call_operand.vmem [shape: f32[2,3,128], index: 0, kind: input, shape index: {}]
  %s1 = inlined_call_operand.vmem [shape: f32[2,8,2], index: 1, kind: input, shape index: {}]
  %s2 = inlined_call_operand.hbm [shape: f32[2,8,128], index: 2, kind: output, shape index: {}]
  %s3 = sld [smem:[#allocation0]]
  $region41: #{_compute_cost_matrix.1} parent=0
    _
  %s5 = ssub.s32 1, %s3
  %s6 = scalar_select 0, %s5, %s3
  $region1: #{_compute_cost_matrix.1} parent=0
    #allocation2 [shape = 'u8[8192]{0}', space=vmem, size = 0x2000, scoped, tag = 'output window, operand 0']
    #allocation3 [shape = 's32[2]{0}', space=sflag, size = 0x8, scoped, tag = 'scoped memory for _compute_cost_matrix.1']
    %7 = vsyncpa [#allocation3], 0
    %s8 = scalar_lea.sflag [#allocation3], 1
    %9 = vsyncpa %s8, 0
    loop: start=0, step=1, limit=4
    $region2: #{_compute_cost_matrix.1} parent=1 // loop_pre_header
      _
    $region3: #{_compute_cost_matrix.1} parent=1 // loop_header
      %s11 = sphi 0, %s15
      %p12 = scmp.ge.s32.totalorder %s11, 4
      %s18 = sphi 0, %s30
      %s19 = sphi 0, %s26
      %s20 = sphi 0, %s18
      %s21 = sphi 0, %s19
      %s22 = sphi 0, %s20
      %s23 = sphi 0, %s21
      %s35 = sphi 0, %s37
      %s38 = sphi 0, %s35
      %s39 = sphi 0, %s38
      %s55 = sphi 0, %s39
      %s61 = sphi 0, %s63
      %s64 = sphi 0, %s61
      %s65 = sphi 0, %s64
      %s81 = sphi 0, %s65
      %s89 = sphi 0, %s91
      %s92 = sphi 0, %s89
      %s93 = sphi 0, %s92
      %s109 = sphi 0, %s93
    $region4: #{_compute_cost_matrix.1} parent=1 // loop_header_branch
      %14 = sbr.rel (%p12) target = $region8
    $region5: #{_compute_cost_matrix.1} parent=1 // loop_body
      %s16 = ssub.s32 %s11, 1
      %s17 = ssub.s32 %s11, 2
      %s24 = sadd.s32 1, %s19
      %p25 = scmp.ge.s32.totalorder %s24, 1
      %s26 = scalar_select %p25, 0, %s24
      %s27 = sadd.s32 1, %s18
      %s28 = scalar_select %p25, %s27, %s18
      %p29 = scmp.ge.s32.totalorder %s28, 2
      %s30 = scalar_select %p29, 0, %s28
      %s31 = ssub.s32 %s18, %s30
      %s32 = ssub.s32 %s19, %s26
      %s33 = sor.u32 %s31, %s32
      %p34 = scmp.eq.s32.totalorder %s33, 0
      %s36 = sadd.s32 %s35, 1
      %s37 = scalar_select %p34, %s35, %s36
      %p40 = pneg %p34
      %p41 = scmp.eq.s32.totalorder %s11, 1
      %p42 = por %p40, %p41
      %p43 = scmp.ne.s32.totalorder %s35, %s38
      %p44 = scmp.eq.s32.totalorder %s11, 0
      %p45 = por %p43, %p44
      %p46 = scmp.ne.s32.totalorder %s35, %s38
      %p47 = scmp.eq.s32.totalorder %s16, 1
      %p48 = por %p46, %p47
      %p49 = scmp.ne.s32.totalorder %s38, %s39
      %p50 = scmp.eq.s32.totalorder %s16, 0
      %p51 = por %p49, %p50
      %p52 = scmp.ne.s32.totalorder %s38, %s39
      %p53 = scmp.eq.s32.totalorder %s17, 1
      %p54 = por %p52, %p53
      %p56 = scmp.ne.s32.totalorder %s39, %s55
      %p57 = scmp.eq.s32.totalorder %s17, 0
      %p58 = por %p56, %p57
      %s59 = ssub.s32 %s18, %s30
      %p60 = scmp.eq.s32.totalorder %s59, 0
      %s62 = sadd.s32 %s61, 1
      %s63 = scalar_select %p60, %s61, %s62
      %p66 = pneg %p60
      %p67 = scmp.eq.s32.totalorder %s11, 1
      %p68 = por %p66, %p67
      %p69 = scmp.ne.s32.totalorder %s61, %s64
      %p70 = scmp.eq.s32.totalorder %s11, 0
      %p71 = por %p69, %p70
      %p72 = scmp.ne.s32.totalorder %s61, %s64
      %p73 = scmp.eq.s32.totalorder %s16, 1
      %p74 = por %p72, %p73
      %p75 = scmp.ne.s32.totalorder %s64, %s65
      %p76 = scmp.eq.s32.totalorder %s16, 0
      %p77 = por %p75, %p76
      %p78 = scmp.ne.s32.totalorder %s64, %s65
      %p79 = scmp.eq.s32.totalorder %s17, 1
      %p80 = por %p78, %p79
      %p82 = scmp.ne.s32.totalorder %s65, %s81
      %p83 = scmp.eq.s32.totalorder %s17, 0
      %p84 = por %p82, %p83
      %s85 = ssub.s32 %s18, %s30
      %s86 = ssub.s32 %s19, %s26
      %s87 = sor.u32 %s85, %s86
      %p88 = scmp.eq.s32.totalorder %s87, 0
      %s90 = sadd.s32 %s89, 1
      %s91 = scalar_select %p88, %s89, %s90
      %p94 = pneg %p88
      %p95 = scmp.eq.s32.totalorder %s11, 1
      %p96 = por %p94, %p95
      %p97 = scmp.ne.s32.totalorder %s89, %s92
      %p98 = scmp.eq.s32.totalorder %s11, 0
      %p99 = por %p97, %p98
      %p100 = scmp.ne.s32.totalorder %s89, %s92
      %p101 = scmp.eq.s32.totalorder %s16, 1
      %p102 = por %p100, %p101
      %p103 = scmp.ne.s32.totalorder %s92, %s93
      %p104 = scmp.eq.s32.totalorder %s16, 0
      %p105 = por %p103, %p104
      %p106 = scmp.ne.s32.totalorder %s92, %s93
      %p107 = scmp.eq.s32.totalorder %s17, 1
      %p108 = por %p106, %p107
      %p110 = scmp.ne.s32.totalorder %s93, %s109
      %p111 = scmp.eq.s32.totalorder %s17, 0
      %p112 = por %p110, %p111
      %p113 = scmp.le.s32.totalorder 1, %s11
      %p114 = scmp.lt.s32.totalorder %s11, 3
      %p115 = pnand %p113, %p114
      %p116 = pneg %p115
      // Predicated region
      $region9: #{_compute_cost_matrix.1} parent=5 // pred_check
        _
      $region10: #{_compute_cost_matrix.1} parent=5 // pred_check_branch
        %118 = sbr.rel (%p115) target = $region12
      $region11: #{_compute_cost_matrix.1} parent=5 // pred_region
        %s119 = ssub.s32 %s11, 1
      $region12: #{_compute_cost_matrix.1} parent=5 // pred_fallthru
        _
      %p120 = scmp.lt.s32.totalorder %s11, 2
      // Predicated region
      $region13: #{_compute_cost_matrix.1} parent=5 // pred_check
        %p121 = pneg %p120
      $region14: #{_compute_cost_matrix.1} parent=5 // pred_check_branch
        %123 = sbr.rel (%p121) target = $region16
      $region15: #{_compute_cost_matrix.1} parent=5 // pred_region
        // Predicated region
        $region17: #{_compute_cost_matrix.1} parent=15 // pred_check
          %p124 = pneg %p45
        $region18: #{_compute_cost_matrix.1} parent=15 // pred_check_branch
          %126 = sbr.rel (%p124) target = $region20
        $region19: #{_compute_cost_matrix.1} parent=15 // pred_region
          %p127 = scmp.lt.s32.totalorder %s18, 1
          %s128 = scalar_select %p127, %s18, 1
          %p129 = scmp.lt.s32.totalorder %s19, 0
          %s130 = scalar_select %p129, %s19, 0
          %s131 = sadd.s32 %s130, %s128
          %s132 = smul.addr %s131, 4
          %s133 = scalar_lea.vmem %s0, %s132
        $region20: #{_compute_cost_matrix.1} parent=15 // pred_fallthru
          _
        // Predicated region
        $region21: #{_compute_cost_matrix.1} parent=15 // pred_check
          %p134 = pneg %p71
        $region22: #{_compute_cost_matrix.1} parent=15 // pred_check_branch
          %136 = sbr.rel (%p134) target = $region24
        $region23: #{_compute_cost_matrix.1} parent=15 // pred_region
          %p137 = scmp.lt.s32.totalorder %s18, 1
          %s138 = scalar_select %p137, %s18, 1
          %s139 = smul.addr %s138, 8
          %s140 = scalar_lea.vmem %s1, %s139
        $region24: #{_compute_cost_matrix.1} parent=15 // pred_fallthru
          _
      $region16: #{_compute_cost_matrix.1} parent=5 // pred_fallthru
        _
      %p141 = scmp.le.s32.totalorder 1, %s11
      %p142 = scmp.lt.s32.totalorder %s11, 3
      %p143 = pnand %p141, %p142
      %p144 = pneg %p143
      // Predicated region
      $region25: #{_compute_cost_matrix.1} parent=5 // pred_check
        _
      $region26: #{_compute_cost_matrix.1} parent=5 // pred_check_branch
        %146 = sbr.rel (%p143) target = $region28
      $region27: #{_compute_cost_matrix.1} parent=5 // pred_region
        %s147 = ssub.s32 %s11, 1
        %p148 = scmp.lt.s32.totalorder %s20, 1
        %s149 = scalar_select %p148, %s20, 1
        %p150 = scmp.lt.s32.totalorder %s21, 0
        %s151 = scalar_select %p150, %s21, 0
        %s152 = sadd.s32 %s151, %s149
        %s153 = smul.addr %s152, 4
        %s154 = scalar_lea.vmem %s0, %s153
        %p155 = pneg %p51
        %p156 = pneg %p48
        %p157 = scmp.lt.s32.totalorder %s20, 1
        %s158 = scalar_select %p157, %s20, 1
        %s159 = smul.addr %s158, 8
        %s160 = scalar_lea.vmem %s1, %s159
        %p161 = pneg %p77
        %p162 = pneg %p74
        %p163 = pneg %p105
        %p164 = pneg %p102
        %s165 = sand.u32 %s92, 1
        %s166 = scalar_lea.sflag [#allocation3], %s165
        %s167 = sand.u32 %s92, 1
        %s168 = smul.addr %s167, 8
        %s169 = scalar_lea.vmem [#allocation2], %s168
        %p170 = scmp.lt.s32.totalorder %s20, 1
        %s171 = scalar_select %p170, %s20, 1
        %p172 = scmp.lt.s32.totalorder %s21, 0
        %s173 = scalar_select %p172, %s21, 0
        %s174 = sadd.s32 %s173, %s171
        %s175 = smul.addr %s174, 4
        %s176 = scalar_lea.vmem %s0, %s175
        %p177 = scmp.lt.s32.totalorder %s20, 1
        %s178 = scalar_select %p177, %s20, 1
        %s179 = smul.addr %s178, 8
        %s180 = scalar_lea.vmem %s1, %s179
        %v181 = vld [vmem:[%s176] sm:$0x1]
        %v182 = vld [vmem:[%s176 + $0x1] sm:$0x1]
        %v183 = vld [vmem:[%s176 + $0x2] sm:$0x1]
        %v184 = vld [vmem:[%s180] sm:$0xff]
        %v185 = vsub.f32 0.0, %v181
        %v186 = vmax.f32 %v185, 0.0
        %v187 = vand.u32 2147483647, %v181
        %v188 = vsub.f32 0.0, %v187
        %v189 = vmul.f32 %v188, 1.442695
        %v190 = vpow.pop %v189
        %v191 = vadd.f32 %v190, 1.0
        %v192 = vlog2.pop %v191
        %v193 = vmul.f32 %v192, 0.6931472
        %v194 = vmul.f32 -0.5, %v190
        %v195 = vadd.f32 %v194, 1.0
        %v196 = vmul.f32 %v195, %v190
        %v197 = vand.u32 2147483647, %v190
        %vm198 = vcmp.lt.f32.partialorder %v197, 0.0004427343
        %v199 = vsel %vm198, %v196, %v193
        %v200 = vadd.f32 %v186, %v199
        %v201 = vmul.f32 %v200, 10.0
        %v202 = vlaneseq
        %v203 = vshrl.u32 %v202, 7
        %v204 = vsub.s32 0, %v203
        %v205 = vrot.slane %v182, %v204
        %207 = vset.pattern.permute.xlu0 0
        %208 = vperm.xlu0 %207, %v184
        %v209 = vpop.permute.xlu0 %208
        %v211 = vsub.f32 %v205, %v209
        %v212 = vand.u32 2147483647, %v211
        %v213 = vlaneseq
        %v214 = vshrl.u32 %v213, 7
        %v215 = vsub.s32 0, %v214
        %v216 = vrot.slane %v183, %v215
        %217 = vset.pattern.permute.xlu0 1
        %218 = vperm.xlu0 %217, %v184
        %v219 = vpop.permute.xlu0 %218
        %v221 = vsub.f32 %v216, %v219
        %v222 = vand.u32 2147483647, %v221
        %v223 = vadd.f32 %v212, %v222
        %v224 = vlaneseq
        %v225 = vshrl.u32 %v224, 7
        %v226 = vsub.s32 0, %v225
        %v227 = vrot.slane %v201, %v226
        %v228 = vadd.f32 %v227, %v223
        %229 = vst [vmem:[%s169] sm:$0xff] %v228
        %s230 = sand.u32 %s92, 1
        %s231 = scalar_lea.sflag [#allocation3], %s230
        %s232 = sand.u32 %s92, 1
        %s233 = smul.addr %s232, 8
        %s234 = scalar_lea.vmem [#allocation2], %s233
        // Predicated region
        $region29: #{_compute_cost_matrix.1} parent=27 // pred_check
          %p235 = pneg %p102
        $region30: #{_compute_cost_matrix.1} parent=27 // pred_check_branch
          %237 = sbr.rel (%p235) target = $region32
        $region31: #{_compute_cost_matrix.1} parent=27 // pred_region
          %s239 = ssub.s32 128, 128
          %240 = vsyncadd %s231, %s239
          %s241 = sadd.s32 %s21, %s20
          %s242 = smul.addr %s241, 128
          %s243 = scalar_lea.hbm %s2, %s242
          %s245 = sshll.u32 %s234, 4
          %s246 = int_to_ptr.vmem [resolvable:$true] %s245
          %248 = dma.vmem_to_hbm [thread:$0]  %s246, 128, %s243, %s231
        $region32: #{_compute_cost_matrix.1} parent=27 // pred_fallthru
          _
      $region28: #{_compute_cost_matrix.1} parent=5 // pred_fallthru
        _
      %p249 = scmp.le.s32.totalorder 2, %s11
      // Predicated region
      $region33: #{_compute_cost_matrix.1} parent=5 // pred_check
        %p250 = pneg %p249
      $region34: #{_compute_cost_matrix.1} parent=5 // pred_check_branch
        %252 = sbr.rel (%p250) target = $region36
      $region35: #{_compute_cost_matrix.1} parent=5 // pred_region
        %s253 = ssub.s32 %s11, 2
        // Predicated region
        $region37: #{_compute_cost_matrix.1} parent=35 // pred_check
          %p254 = pneg %p108
        $region38: #{_compute_cost_matrix.1} parent=35 // pred_check_branch
          %256 = sbr.rel (%p254) target = $region40
        $region39: #{_compute_cost_matrix.1} parent=35 // pred_region
          %s257 = sand.u32 %s93, 1
          %s258 = scalar_lea.sflag [#allocation3], %s257
          %s259 = sand.u32 %s93, 1
          %s260 = smul.addr %s259, 8
          %s261 = scalar_lea.vmem [#allocation2], %s260
          %262 = dma.done %s258, 128
        $region40: #{_compute_cost_matrix.1} parent=35 // pred_fallthru
          _
      $region36: #{_compute_cost_matrix.1} parent=5 // pred_fallthru
        _
    $region6: #{_compute_cost_matrix.1} parent=1 // loop_footer
      %s15 = sadd.s32 1, %s11
    $region7: #{_compute_cost_matrix.1} parent=1 // loop_footer_branch
      %10 = sbr.rel target = $region3
    $region8: #{_compute_cost_matrix.1} parent=1 // loop_exit
      _
    %263 = vsyncpa [#allocation3], 1
    %s264 = scalar_lea.sflag [#allocation3], 1
    %265 = vsyncpa %s264, 1

</llo_original>
